<compile_context>
chip_gen: v6e
topology: v6e:2x2x1
jax: 0.10.0
libtpu: 0.0.40
codegen_flags: <defaults>
</compile_context>

<pallas_src>
import functools
import math

import jax
import jax.numpy as jnp
from jax import lax
from jax.experimental import pallas as pl
from jax.experimental.pallas import tpu as pltpu


# ---------------------------------------------------------------------------
# Tile-selection helper.
# ---------------------------------------------------------------------------
def _largest_divisor_leq(n, cap, multiple=1):
    """Largest divisor of n that is <= cap and (== n or a multiple of `multiple`)."""
    cap = max(1, min(cap, n))
    for c in range(cap, 0, -1):
        if n % c == 0 and (c == n or c % multiple == 0):
            return c
    return n


# ---------------------------------------------------------------------------
# Pallas kernel 1: fused rotary application for one (TN, TS, D) block of t.
# cos_ref / sin_ref hold the half-width (TS, D//2) precomputed tables.
# ---------------------------------------------------------------------------
def _rotary_kernel(cos_ref, sin_ref, t_ref, o_ref):
    cos = cos_ref[...]                       # (TS, D//2) f32
    sin = sin_ref[...]                       # (TS, D//2) f32

    # f32 compute matches the reference math (torch promotes t to f32 against
    # the f32 freqs, then casts back).
    t = t_ref[...].astype(jnp.float32)       # (TN, TS, D)
    half = t.shape[-1] // 2
    x1 = t[..., :half]
    x2 = t[..., half:]

    # Equivalent to t * cos_full + rotate_half(t) * sin_full, where
    # cos_full = [c, c], sin_full = [s, s], rotate_half(t) = [-x2, x1].
    o1 = x1 * cos[None] - x2 * sin[None]
    o2 = x2 * cos[None] + x1 * sin[None]

    # Single full-width store (halves assembled in vregs).
    o_ref[...] = jnp.concatenate([o1, o2], axis=-1).astype(o_ref.dtype)


def apply_rotary_emb_pallas(cos_half, sin_half, t, *,
                            seq_tile_cap=512,
                            block_budget_bytes=4 * 1024 * 1024):
    """cos_half/sin_half: [S, D//2] float32; t: [N, S, D]. Returns rotated t."""
    n, s, d = t.shape
    assert d % 2 == 0, "head_dim must be even for rotary embedding"
    half = d // 2
    assert cos_half.shape == (s, half) and sin_half.shape == (s, half)

    # Sequence tile: multiple of 8 (sublane) unless it is the full extent.
    ts = _largest_divisor_leq(s, seq_tile_cap, multiple=8)
    # Head tile: as many head-rows as fit the per-block byte budget
    # (>=4 bytes/elem since the kernel computes in f32).
    per_row_bytes = ts * d * max(int(jnp.dtype(t.dtype).itemsize), 4)
    tn = _largest_divisor_leq(n, max(1, block_budget_bytes // per_row_bytes))

    # S-tiles outer, N-tiles inner: cos/sin only change with the outer axis.
    grid = (s // ts, n // tn)

    return pl.pallas_call(
        _rotary_kernel,
        out_shape=jax.ShapeDtypeStruct((n, s, d), t.dtype),
        grid=grid,
        in_specs=[
            pl.BlockSpec((ts, half), lambda sj, ni: (sj, 0)),       # cos
            pl.BlockSpec((ts, half), lambda sj, ni: (sj, 0)),       # sin
            pl.BlockSpec((tn, ts, d), lambda sj, ni: (ni, sj, 0)),  # t block
        ],
        out_specs=pl.BlockSpec((tn, ts, d), lambda sj, ni: (ni, sj, 0)),
        compiler_params=pltpu.CompilerParams(
            dimension_semantics=("parallel", "parallel"),
            vmem_limit_bytes=32 * 1024 * 1024,
        ),
    )(cos_half.astype(jnp.float32), sin_half.astype(jnp.float32), t)


# ---------------------------------------------------------------------------
# Pallas kernel 2: causal flash-attention core (online softmax).
# q/k/v blocks are (N, tq, D) / (N, tk, D) with N = batch * heads resident.
# ---------------------------------------------------------------------------
_MASK_VALUE = -0.7 * float(jnp.finfo(jnp.float32).max)


def _flash_attn_kernel(q_ref, k_ref, v_ref, o_ref, m_sc, l_sc, acc_sc,
                       *, sm_scale, q_offset):
    qi = pl.program_id(0)
    ki = pl.program_id(1)

    @pl.when(ki == 0)
    def _():
        m_sc[...] = jnp.full(m_sc.shape, -jnp.inf, dtype=jnp.float32)
        l_sc[...] = jnp.zeros(l_sc.shape, dtype=jnp.float32)
        acc_sc[...] = jnp.zeros(acc_sc.shape, dtype=jnp.float32)

    q = q_ref[...].astype(jnp.float32)       # (N, tq, D)
    k = k_ref[...].astype(jnp.float32)       # (N, tk, D)
    v = v_ref[...].astype(jnp.float32)       # (N, tk, D)
    tq = q.shape[1]
    tk = k.shape[1]

    s = jnp.einsum("nqd,nkd->nqk", q, k,
                   preferred_element_type=jnp.float32) * sm_scale

    # Causal mask: global query position (with offset) >= key position.
    q_pos = qi * tq + q_offset + lax.broadcasted_iota(jnp.int32, (tq, tk), 0)
    k_pos = ki * tk + lax.broadcasted_iota(jnp.int32, (tq, tk), 1)
    s = jnp.where((q_pos >= k_pos)[None, :, :], s, _MASK_VALUE)

    m_prev = m_sc[...]
    m_new = jnp.maximum(m_prev, s.max(axis=-1, keepdims=True))
    alpha = jnp.exp(m_prev - m_new)
    p = jnp.exp(s - m_new)
    l_sc[...] = alpha * l_sc[...] + p.sum(axis=-1, keepdims=True)
    acc_sc[...] = alpha * acc_sc[...] + jnp.einsum(
        "nqk,nkd->nqd", p, v, preferred_element_type=jnp.float32)
    m_sc[...] = m_new

    @pl.when(ki == pl.num_programs(1) - 1)
    def _():
        o_ref[...] = (acc_sc[...] / l_sc[...]).astype(o_ref.dtype)


def flash_attention_pallas(q, k, v, *, sm_scale, q_offset=0,
                           tq_cap=256, tk_cap=256):
    """q: [N, Sq, D]; k, v: [N, Sk, D]. Causal attention, returns [N, Sq, D]."""
    n, sq, d = q.shape
    _, sk, _ = k.shape
    tq = _largest_divisor_leq(sq, tq_cap, multiple=8)
    tk = _largest_divisor_leq(sk, tk_cap, multiple=8)
    grid = (sq // tq, sk // tk)

    kernel = functools.partial(_flash_attn_kernel,
                               sm_scale=float(sm_scale),
                               q_offset=int(q_offset))
    return pl.pallas_call(
        kernel,
        out_shape=jax.ShapeDtypeStruct((n, sq, d), q.dtype),
        grid_spec=pltpu.PrefetchScalarGridSpec(
            num_scalar_prefetch=0,
            grid=grid,
            in_specs=[
                pl.BlockSpec((n, tq, d), lambda qi, ki: (0, qi, 0)),
                pl.BlockSpec((n, tk, d), lambda qi, ki: (0, ki, 0)),
                pl.BlockSpec((n, tk, d), lambda qi, ki: (0, ki, 0)),
            ],
            out_specs=pl.BlockSpec((n, tq, d), lambda qi, ki: (0, qi, 0)),
            scratch_shapes=[
                pltpu.VMEM((n, tq, 1), jnp.float32),   # running max
                pltpu.VMEM((n, tq, 1), jnp.float32),   # running denom
                pltpu.VMEM((n, tq, d), jnp.float32),   # accumulator
            ],
        ),
        compiler_params=pltpu.CompilerParams(
            dimension_semantics=("parallel", "arbitrary"),
            vmem_limit_bytes=32 * 1024 * 1024,
        ),
    )(q, k, v)


# ---------------------------------------------------------------------------
# JAX-side module mirroring RotaryEmbedding (use_xpos=False path).
# ---------------------------------------------------------------------------
class RotaryEmbedding:
    def __init__(self, dim, theta=10000):
        self.dim = dim
        self.theta = theta
        self.inv_freq = 1.0 / theta ** (
            jnp.arange(0, dim, 2, dtype=jnp.float32) / dim
        )

    def get_ntk_alpha(self, true_seq_len):
        context_value = math.log(true_seq_len / 4096, 2) + 1
        ntk_alpha = 2 ** math.ceil(context_value) - 1
        return max(ntk_alpha, 1)

    def _half_freqs(self, seq, true_seq_len):
        ntk_alpha = self.get_ntk_alpha(true_seq_len)
        theta = self.theta * ntk_alpha
        inv_freq = 1.0 / theta ** (
            jnp.arange(0, self.dim, 2, dtype=jnp.float32) / self.dim
        )
        return jnp.einsum("i,j->ij", seq, inv_freq)          # (S, dim/2)

    def forward(self, seq, true_seq_len):
        f = self._half_freqs(seq, true_seq_len)
        return jnp.concatenate([f, f], axis=-1)              # (S, dim)

    def rotate_queries_or_keys(self, t, offset=0):
        # t: [N, S, D], D == self.dim
        seq_len = t.shape[-2]
        pos = jnp.arange(offset, offset + seq_len, dtype=jnp.float32)
        freqs_half = self._half_freqs(pos, offset + seq_len)  # (S, D/2)
        # Transcendentals hoisted out of the kernel (computed once per call).
        cos_half = jnp.cos(freqs_half)
        sin_half = jnp.sin(freqs_half)
        return apply_rotary_emb_pallas(cos_half, sin_half, t)


# ---------------------------------------------------------------------------
# TELECHATAttention forward (inference / eval mode, no dropout).
# ---------------------------------------------------------------------------
class TELECHATAttentionPallas:
    def __init__(self, config, layer_idx=1, *, key):
        self.embed_dim = config["hidden_size"]
        self.num_heads = config["num_attention_heads"]
        self.head_dim = self.embed_dim // self.num_heads
        assert self.head_dim * self.num_heads == self.embed_dim
        self.scale_attn_weights = config["scale_attn_weights"]
        self.use_mup = config["use_mup"]
        self.layer_idx = max(1, layer_idx)

        k1, k2 = jax.random.split(key)
        std = 0.02
        self.w_attn = std * jax.random.normal(
            k1, (self.embed_dim, 3 * self.embed_dim), dtype=jnp.float32)
        self.w_proj = std * jax.random.normal(
            k2, (self.embed_dim, self.embed_dim), dtype=jnp.float32)
        if config["add_bias_linear"]:
            self.b_attn = jnp.zeros((3 * self.embed_dim,), jnp.float32)
            self.b_proj = jnp.zeros((self.embed_dim,), jnp.float32)
        else:
            self.b_attn = None
            self.b_proj = None

    def _split_heads(self, x):
        b, s, _ = x.shape
        return x.reshape(b, s, self.num_heads, self.head_dim).transpose(0, 2, 1, 3)

    def _merge_heads(self, x):
        b, h, s, d = x.shape
        return x.transpose(0, 2, 1, 3).reshape(b, s, h * d)

    def forward(self, hidden_states, layer_past=None, rotary_embedding=None,
                use_cache=False):
        # TODO(synk): c_attn / c_proj projections, additive attention_mask,
        # head_mask and dropout are left to XLA (eval mode, no dropout).
        qkv = jnp.dot(hidden_states, self.w_attn)
        if self.b_attn is not None:
            qkv = qkv + self.b_attn
        query, key, value = jnp.split(qkv, 3, axis=-1)

        query = self._split_heads(query)
        key = self._split_heads(key)
        value = self._split_heads(value)

        if layer_past is not None:
            past_key, past_value = layer_past
            key = jnp.concatenate([past_key, key], axis=-2)
            value = jnp.concatenate([past_value, value], axis=-2)
        present = (key, value) if use_cache else None

        b, h, sk, d = key.shape
        sq = query.shape[-2]
        q_offset = sk - sq

        qf = query.reshape(b * h, sq, d)
        kf = key.reshape(b * h, sk, d)
        vf = value.reshape(b * h, sk, d)

        if rotary_embedding is not None:
            qf = rotary_embedding.rotate_queries_or_keys(qf, offset=q_offset)
            kf = rotary_embedding.rotate_queries_or_keys(kf)

        # scale_attn_weights: both mup and non-mup paths reduce to 1/sqrt(D).
        sm_scale = 1.0 / (float(d) ** 0.5) if self.scale_attn_weights else 1.0

        attn = flash_attention_pallas(qf, kf, vf, sm_scale=sm_scale,
                                      q_offset=q_offset)
        attn = self._merge_heads(attn.reshape(b, h, sq, d))

        out = jnp.dot(attn, self.w_proj)
        if self.b_proj is not None:
            out = out + self.b_proj
        return out, present


# ---------------------------------------------------------------------------
# Pure-JAX reference of the PyTorch math, for verification.
# ---------------------------------------------------------------------------
def _rotate_half_ref(x):
    x1, x2 = jnp.split(x, 2, axis=-1)
    return jnp.concatenate([-x2, x1], axis=-1)


def _apply_rotary_ref(freqs, t):
    return (t * jnp.cos(freqs) + _rotate_half_ref(t) * jnp.sin(freqs)).astype(t.dtype)


def _attn_ref(q, k, v, sm_scale, q_offset):
    # q: (N,Sq,D); k,v: (N,Sk,D)
    sq, sk = q.shape[1], k.shape[1]
    s = jnp.einsum("nqd,nkd->nqk", q, k) * sm_scale
    q_pos = q_offset + jnp.arange(sq)[:, None]
    k_pos = jnp.arange(sk)[None, :]
    mask = q_pos >= k_pos
    s = jnp.where(mask[None], s, jnp.finfo(s.dtype).min)
    p = jax.nn.softmax(s, axis=-1)
    return jnp.einsum("nqk,nkd->nqd", p, v)


def _forward_ref(attn_mod, rope, hidden_states):
    qkv = jnp.dot(hidden_states, attn_mod.w_attn)
    if attn_mod.b_attn is not None:
        qkv = qkv + attn_mod.b_attn
    query, key, value = jnp.split(qkv, 3, axis=-1)
    query = attn_mod._split_heads(query)
    key = attn_mod._split_heads(key)
    value = attn_mod._split_heads(value)
    b, h, sk, d = key.shape
    sq = query.shape[-2]
    q_offset = sk - sq
    qf = query.reshape(b * h, sq, d)
    kf = key.reshape(b * h, sk, d)
    vf = value.reshape(b * h, sk, d)
    pos_q = jnp.arange(q_offset, q_offset + sq, dtype=jnp.float32)
    pos_k = jnp.arange(0, sk, dtype=jnp.float32)
    freqs_q = rope.forward(pos_q, q_offset + sq)
    freqs_k = rope.forward(pos_k, sk)
    qf = _apply_rotary_ref(freqs_q[None], qf)
    kf = _apply_rotary_ref(freqs_k[None], kf)
    sm_scale = 1.0 / (float(d) ** 0.5) if attn_mod.scale_attn_weights else 1.0
    attn = _attn_ref(qf, kf, vf, sm_scale, q_offset)
    attn = attn_mod._merge_heads(attn.reshape(b, h, sq, d))
    out = jnp.dot(attn, attn_mod.w_proj)
    if attn_mod.b_proj is not None:
        out = out + attn_mod.b_proj
    return out


if __name__ == "__main__":
    batch, heads, seq, head_dim = 2, 4, 8, 32
    hidden = heads * head_dim                 # 128

    config = dict(
        hidden_size=hidden,
        num_attention_heads=heads,
        scale_attn_weights=True,
        scale_attn_by_inverse_layer_idx=False,
        use_mup=False,
        add_bias_linear=True,
        attn_pdrop=0.0,
        resid_pdrop=0.0,
    )

    root = jax.random.PRNGKey(0)
    k_w, k_x = jax.random.split(root)

    attn_mod = TELECHATAttentionPallas(config, layer_idx=1, key=k_w)
    rope = RotaryEmbedding(dim=head_dim, theta=10000)

    hidden_states = jax.random.normal(k_x, (batch, seq, hidden), dtype=jnp.float32)

    out, present = attn_mod.forward(hidden_states, rotary_embedding=rope,
                                    use_cache=False)
    out = jax.block_until_ready(out)

    # correctness check against the pure-JAX reference of the PyTorch math
    ref = _forward_ref(attn_mod, rope, hidden_states)
    assert out.shape == hidden_states.shape and out.dtype == hidden_states.dtype
    assert present is None
    assert jnp.allclose(out, ref, atol=1e-4, rtol=1e-4), float(
        jnp.max(jnp.abs(out - ref)))

    print("KERNEL_OK")
</pallas_src>

<mosaic_0001>
module attributes {stable_mosaic.version = 11 : i64} {
  func.func @_rotary_kernel(%arg0: i32, %arg1: i32, %arg2: memref<8x16xf32, #tpu.memory_space<vmem>>, %arg3: memref<8x16xf32, #tpu.memory_space<vmem>>, %arg4: memref<8x8x32xf32, #tpu.memory_space<vmem>>, %arg5: memref<8x8x32xf32, #tpu.memory_space<vmem>>) attributes {dimension_semantics = [#tpu.dimension_semantics<parallel>, #tpu.dimension_semantics<parallel>], iteration_bounds = array<i64: 1, 1>, scalar_prefetch = 0 : i64, scratch_operands = 0 : i64, tpu.core_type = #tpu.core_type<tc>, window_params = [{transform_indices = @transform_0, window_bounds = array<i64: 8, 16>}, {transform_indices = @transform_1, window_bounds = array<i64: 8, 16>}, {transform_indices = @transform_2, window_bounds = array<i64: 8, 8, 32>}, {transform_indices = @transform_3, window_bounds = array<i64: 8, 8, 32>}]} {
    %c0 = arith.constant 0 : index
    %c0_0 = arith.constant 0 : index
    %0 = vector.load %arg2[%c0, %c0_0] : memref<8x16xf32, #tpu.memory_space<vmem>>, vector<8x16xf32>
    %c0_1 = arith.constant 0 : index
    %c0_2 = arith.constant 0 : index
    %1 = vector.load %arg3[%c0_1, %c0_2] : memref<8x16xf32, #tpu.memory_space<vmem>>, vector<8x16xf32>
    %c0_3 = arith.constant 0 : index
    %c0_4 = arith.constant 0 : index
    %c0_5 = arith.constant 0 : index
    %2 = vector.load %arg4[%c0_3, %c0_4, %c0_5] : memref<8x8x32xf32, #tpu.memory_space<vmem>>, vector<8x8x32xf32>
    %3 = vector.extract_strided_slice %2 {offsets = [0, 0, 0], sizes = [8, 8, 16], strides = [1, 1, 1]} : vector<8x8x32xf32> to vector<8x8x16xf32>
    %4 = vector.extract_strided_slice %2 {offsets = [0, 0, 16], sizes = [8, 8, 16], strides = [1, 1, 1]} : vector<8x8x32xf32> to vector<8x8x16xf32>
    %5 = vector.shape_cast %0 : vector<8x16xf32> to vector<1x8x16xf32>
    %6 = vector.broadcast %5 : vector<1x8x16xf32> to vector<8x8x16xf32>
    %7 = arith.mulf %3, %6 : vector<8x8x16xf32>
    %8 = vector.shape_cast %1 : vector<8x16xf32> to vector<1x8x16xf32>
    %9 = vector.broadcast %8 : vector<1x8x16xf32> to vector<8x8x16xf32>
    %10 = arith.mulf %4, %9 : vector<8x8x16xf32>
    %11 = arith.subf %7, %10 : vector<8x8x16xf32>
    %12 = vector.shape_cast %0 : vector<8x16xf32> to vector<1x8x16xf32>
    %13 = vector.broadcast %12 : vector<1x8x16xf32> to vector<8x8x16xf32>
    %14 = arith.mulf %4, %13 : vector<8x8x16xf32>
    %15 = vector.shape_cast %1 : vector<8x16xf32> to vector<1x8x16xf32>
    %16 = vector.broadcast %15 : vector<1x8x16xf32> to vector<8x8x16xf32>
    %17 = arith.mulf %3, %16 : vector<8x8x16xf32>
    %18 = arith.addf %14, %17 : vector<8x8x16xf32>
    %19 = tpu.concatenate %11, %18 in 2 : vector<8x8x16xf32>, vector<8x8x16xf32> -> vector<8x8x32xf32>
    %c0_6 = arith.constant 0 : index
    %c0_7 = arith.constant 0 : index
    %c0_8 = arith.constant 0 : index
    %20 = vector.load %arg5[%c0_6, %c0_7, %c0_8] : memref<8x8x32xf32, #tpu.memory_space<vmem>>, vector<8x8x32xf32>
    tpu.vector_store %arg5[%c0_6, %c0_7, %c0_8], %19 {strides = array<i32>} : memref<8x8x32xf32, #tpu.memory_space<vmem>>, vector<8x8x32xf32>,
    return
  }
  func.func @transform_0(%arg0: i32, %arg1: i32) -> (i32, i32) {
    %c0_i32 = arith.constant 0 : i32
    %c0_i32_0 = arith.constant 0 : i32
    return %arg0, %c0_i32 : i32, i32
  }
  func.func @transform_1(%arg0: i32, %arg1: i32) -> (i32, i32) {
    %c0_i32 = arith.constant 0 : i32
    %c0_i32_0 = arith.constant 0 : i32
    return %arg0, %c0_i32 : i32, i32
  }
  func.func @transform_2(%arg0: i32, %arg1: i32) -> (i32, i32, i32) {
    %c0_i32 = arith.constant 0 : i32
    %c0_i32_0 = arith.constant 0 : i32
    return %arg1, %arg0, %c0_i32 : i32, i32, i32
  }
  func.func @transform_3(%arg0: i32, %arg1: i32) -> (i32, i32, i32) {
    %c0_i32 = arith.constant 0 : i32
    %c0_i32_0 = arith.constant 0 : i32
    return %arg1, %arg0, %c0_i32 : i32, i32, i32
  }
}

</mosaic_0001>

<llo_original>
// kernel: tpu_custom_call.1
$region0: #{tpu_custom_call.1}
  #allocation0 [shape = 'u32[]', space=smem, size = 0x4, offset = 0x4, fixed_abs, tag = 'smem constant byte address 0x4 - core index']
  #allocation1 [shape = 'u32[144,128]{1,0:T(1,128)}', space=vmem, size = 0x12000, scoped, tag = 'internal scratch']
  %s0 = inlined_call_operand.hbm [shape: f32[8,16], index: 0, kind: input, shape index: {}]
  %s1 = inlined_call_operand.hbm [shape: f32[8,16], index: 1, kind: input, shape index: {}]
  %s2 = inlined_call_operand.hbm [shape: f32[8,8,32], index: 2, kind: input, shape index: {}]
  %s3 = inlined_call_operand.hbm [shape: f32[8,8,32], index: 3, kind: output, shape index: {}]
  %s4 = sld [smem:[#allocation0]]
  $region34: #{tpu_custom_call.1} parent=0
    _
  %s6 = ssub.s32 1, %s4
  %s7 = scalar_select 0, %s6, %s4
  $region1: #{tpu_custom_call.1} parent=0
    #allocation2 [shape = 'u8[4096]{0}', space=vmem, size = 0x1000, scoped, tag = 'input window, operand 0, single buffered']
    #allocation3 [shape = 's32[1]{0}', space=sflag, size = 0x4, scoped, tag = 'scoped memory for tpu_custom_call.1']
    #allocation4 [shape = 's32[1]{0}', space=sflag, size = 0x4, scoped, tag = 'scoped memory for tpu_custom_call.1']
    #allocation5 [shape = 'u8[4096]{0}', space=vmem, size = 0x1000, scoped, tag = 'input window, operand 1, single buffered']
    #allocation6 [shape = 's32[1]{0}', space=sflag, size = 0x4, scoped, tag = 'scoped memory for tpu_custom_call.1']
    #allocation7 [shape = 'u8[32768]{0}', space=vmem, size = 0x8000, scoped, tag = 'input window, operand 2, single buffered']
    #allocation8 [shape = 'u8[32768]{0}', space=vmem, size = 0x8000, scoped, tag = 'output window, operand 0, single buffered']
    %8 = vsyncpa [#allocation3], 0
    %9 = vsyncpa [#allocation6], 0
    %10 = vsyncpa [#allocation4], 0
    // Predicated region
    $region2: #{tpu_custom_call.1} parent=1 // pred_check
      _
    $region3: #{tpu_custom_call.1} parent=1 // pred_check_branch
      %12 = sbr.rel (0) target = $region5
    $region4: #{tpu_custom_call.1} parent=1 // pred_region
      %s14 = ssub.s32 128, 128
      %15 = vsyncadd [#allocation3], %s14
      %s17 = sshll.u32 [#allocation2], 4
      %s18 = int_to_ptr.vmem [resolvable:$true] %s17
      %20 = dma.hbm_to_vmem [thread:$0]  %s0, 128, %s18, [#allocation3]
    $region5: #{tpu_custom_call.1} parent=1 // pred_fallthru
      _
    // Predicated region
    $region6: #{tpu_custom_call.1} parent=1 // pred_check
      _
    $region7: #{tpu_custom_call.1} parent=1 // pred_check_branch
      %22 = sbr.rel (0) target = $region9
    $region8: #{tpu_custom_call.1} parent=1 // pred_region
      %s24 = ssub.s32 128, 128
      %25 = vsyncadd [#allocation6], %s24
      %s27 = sshll.u32 [#allocation5], 4
      %s28 = int_to_ptr.vmem [resolvable:$true] %s27
      %30 = dma.hbm_to_vmem [thread:$0]  %s1, 128, %s28, [#allocation6]
    $region9: #{tpu_custom_call.1} parent=1 // pred_fallthru
      _
    // Predicated region
    $region10: #{tpu_custom_call.1} parent=1 // pred_check
      _
    $region11: #{tpu_custom_call.1} parent=1 // pred_check_branch
      %32 = sbr.rel (0) target = $region13
    $region12: #{tpu_custom_call.1} parent=1 // pred_region
      %s34 = ssub.s32 1024, 1024
      %35 = vsyncadd [#allocation6], %s34
      %s36 = sshll.u32 [#allocation7], 4
      %s37 = int_to_ptr.vmem [resolvable:$true] %s36
      %42 = dma.hbm_to_vmem [thread:$0]  %s2, 1024, %s37, [#allocation6], 128, 128, 8
    $region13: #{tpu_custom_call.1} parent=1 // pred_fallthru
      _
    // Predicated region
    $region14: #{tpu_custom_call.1} parent=1 // pred_check
      _
    $region15: #{tpu_custom_call.1} parent=1 // pred_check_branch
      %44 = sbr.rel (0) target = $region17
    $region16: #{tpu_custom_call.1} parent=1 // pred_region
      %45 = dma.done [#allocation3], 128
    $region17: #{tpu_custom_call.1} parent=1 // pred_fallthru
      _
    // Predicated region
    $region18: #{tpu_custom_call.1} parent=1 // pred_check
      _
    $region19: #{tpu_custom_call.1} parent=1 // pred_check_branch
      %47 = sbr.rel (0) target = $region21
    $region20: #{tpu_custom_call.1} parent=1 // pred_region
      %48 = dma.done [#allocation6], 128
    $region21: #{tpu_custom_call.1} parent=1 // pred_fallthru
      _
    // Predicated region
    $region22: #{tpu_custom_call.1} parent=1 // pred_check
      _
    $region23: #{tpu_custom_call.1} parent=1 // pred_check_branch
      %50 = sbr.rel (0) target = $region25
    $region24: #{tpu_custom_call.1} parent=1 // pred_region
      %51 = dma.done [#allocation6], 1024
    $region25: #{tpu_custom_call.1} parent=1 // pred_fallthru
      _
    %v52 = vld [vmem:[#allocation2] sm:$0xff]
    %v53 = vld [vmem:[#allocation5] sm:$0xff]
    %v54 = vld [vmem:[#allocation7] sm:$0xff]
    %v55 = vld [vmem:[#allocation7 + $0x8] sm:$0xff]
    %v56 = vld [vmem:[#allocation7 + $0x10] sm:$0xff]
    %v57 = vld [vmem:[#allocation7 + $0x18] sm:$0xff]
    %v58 = vld [vmem:[#allocation7 + $0x20] sm:$0xff]
    %v59 = vld [vmem:[#allocation7 + $0x28] sm:$0xff]
    %v60 = vld [vmem:[#allocation7 + $0x30] sm:$0xff]
    %v61 = vld [vmem:[#allocation7 + $0x38] sm:$0xff]
    %v62 = vmul.f32 %v54, %v52
    %v63 = vmul.f32 %v55, %v52
    %v64 = vmul.f32 %v56, %v52
    %v65 = vmul.f32 %v57, %v52
    %v66 = vmul.f32 %v58, %v52
    %v67 = vmul.f32 %v59, %v52
    %v68 = vmul.f32 %v60, %v52
    %v69 = vmul.f32 %v61, %v52
    %71 = vrot.lane.b32.xlu0 %v53, 16
    %v72 = vpop.permute.xlu0 %71
    %v74 = vmul.f32 %v54, %v72
    %v75 = vmul.f32 %v55, %v72
    %v76 = vmul.f32 %v56, %v72
    %v77 = vmul.f32 %v57, %v72
    %v78 = vmul.f32 %v58, %v72
    %v79 = vmul.f32 %v59, %v72
    %v80 = vmul.f32 %v60, %v72
    %v81 = vmul.f32 %v61, %v72
    %90 = vrot.lane.b32.xlu0 %v74, 112
    %v91 = vpop.permute.xlu0 %90
    %92 = vrot.lane.b32.xlu0 %v75, 112
    %v93 = vpop.permute.xlu0 %92
    %94 = vrot.lane.b32.xlu0 %v76, 112
    %v95 = vpop.permute.xlu0 %94
    %96 = vrot.lane.b32.xlu0 %v77, 112
    %v97 = vpop.permute.xlu0 %96
    %98 = vrot.lane.b32.xlu0 %v78, 112
    %v99 = vpop.permute.xlu0 %98
    %100 = vrot.lane.b32.xlu0 %v79, 112
    %v101 = vpop.permute.xlu0 %100
    %102 = vrot.lane.b32.xlu0 %v80, 112
    %v103 = vpop.permute.xlu0 %102
    %104 = vrot.lane.b32.xlu0 %v81, 112
    %v105 = vpop.permute.xlu0 %104
    %v114 = vsub.f32 %v62, %v91
    %v115 = vsub.f32 %v63, %v93
    %v116 = vsub.f32 %v64, %v95
    %v117 = vsub.f32 %v65, %v97
    %v118 = vsub.f32 %v66, %v99
    %v119 = vsub.f32 %v67, %v101
    %v120 = vsub.f32 %v68, %v103
    %v121 = vsub.f32 %v69, %v105
    %123 = vrot.lane.b32.xlu0 %v52, 16
    %v124 = vpop.permute.xlu0 %123
    %v126 = vmul.f32 %v54, %v124
    %v127 = vmul.f32 %v55, %v124
    %v128 = vmul.f32 %v56, %v124
    %v129 = vmul.f32 %v57, %v124
    %v130 = vmul.f32 %v58, %v124
    %v131 = vmul.f32 %v59, %v124
    %v132 = vmul.f32 %v60, %v124
    %v133 = vmul.f32 %v61, %v124
    %v134 = vmul.f32 %v54, %v53
    %v135 = vmul.f32 %v55, %v53
    %v136 = vmul.f32 %v56, %v53
    %v137 = vmul.f32 %v57, %v53
    %v138 = vmul.f32 %v58, %v53
    %v139 = vmul.f32 %v59, %v53
    %v140 = vmul.f32 %v60, %v53
    %v141 = vmul.f32 %v61, %v53
    %150 = vrot.lane.b32.xlu0 %v134, 16
    %v151 = vpop.permute.xlu0 %150
    %152 = vrot.lane.b32.xlu0 %v135, 16
    %v153 = vpop.permute.xlu0 %152
    %154 = vrot.lane.b32.xlu0 %v136, 16
    %v155 = vpop.permute.xlu0 %154
    %156 = vrot.lane.b32.xlu0 %v137, 16
    %v157 = vpop.permute.xlu0 %156
    %158 = vrot.lane.b32.xlu0 %v138, 16
    %v159 = vpop.permute.xlu0 %158
    %160 = vrot.lane.b32.xlu0 %v139, 16
    %v161 = vpop.permute.xlu0 %160
    %162 = vrot.lane.b32.xlu0 %v140, 16
    %v163 = vpop.permute.xlu0 %162
    %164 = vrot.lane.b32.xlu0 %v141, 16
    %v165 = vpop.permute.xlu0 %164
    %v174 = vadd.f32 %v126, %v151
    %v175 = vadd.f32 %v127, %v153
    %v176 = vadd.f32 %v128, %v155
    %v177 = vadd.f32 %v129, %v157
    %v178 = vadd.f32 %v130, %v159
    %v179 = vadd.f32 %v131, %v161
    %v180 = vadd.f32 %v132, %v163
    %v181 = vadd.f32 %v133, %v165
    %vm182 = vcmask 130048
    %v183 = vsel %vm182, %v114, %v174
    %v184 = vsel %vm182, %v115, %v175
    %v185 = vsel %vm182, %v116, %v176
    %v186 = vsel %vm182, %v117, %v177
    %v187 = vsel %vm182, %v118, %v178
    %v188 = vsel %vm182, %v119, %v179
    %v189 = vsel %vm182, %v120, %v180
    %v190 = vsel %vm182, %v121, %v181
    %vm191 = vcmask 261120
    %192 = vst.msk [vmem:[#allocation8] sm:$0xff] %vm191, %v183
    %193 = vst.msk [vmem:[#allocation8 + $0x8] sm:$0xff] %vm191, %v184
    %194 = vst.msk [vmem:[#allocation8 + $0x10] sm:$0xff] %vm191, %v185
    %195 = vst.msk [vmem:[#allocation8 + $0x18] sm:$0xff] %vm191, %v186
    %196 = vst.msk [vmem:[#allocation8 + $0x20] sm:$0xff] %vm191, %v187
    %197 = vst.msk [vmem:[#allocation8 + $0x28] sm:$0xff] %vm191, %v188
    %198 = vst.msk [vmem:[#allocation8 + $0x30] sm:$0xff] %vm191, %v189
    %199 = vst.msk [vmem:[#allocation8 + $0x38] sm:$0xff] %vm191, %v190
    // Predicated region
    $region26: #{tpu_custom_call.1} parent=1 // pred_check
      _
    $region27: #{tpu_custom_call.1} parent=1 // pred_check_branch
      %201 = sbr.rel (0) target = $region29
    $region28: #{tpu_custom_call.1} parent=1 // pred_region
      %s203 = ssub.s32 1024, 1024
      %204 = vsyncadd [#allocation4], %s203
      %s205 = sshll.u32 [#allocation8], 4
      %s206 = int_to_ptr.vmem [resolvable:$true] %s205
      %211 = dma.vmem_to_hbm [thread:$0]  %s206, 1024, %s3, [#allocation4], 128, 128, 8
    $region29: #{tpu_custom_call.1} parent=1 // pred_fallthru
      _
    // Predicated region
    $region30: #{tpu_custom_call.1} parent=1 // pred_check
      _
    $region31: #{tpu_custom_call.1} parent=1 // pred_check_branch
      %213 = sbr.rel (0) target = $region33
    $region32: #{tpu_custom_call.1} parent=1 // pred_region
      %214 = dma.done [#allocation4], 1024
    $region33: #{tpu_custom_call.1} parent=1 // pred_fallthru
      _
    %215 = vsyncpa [#allocation3], 1
    %216 = vsyncpa [#allocation6], 1
    %217 = vsyncpa [#allocation4], 1

</llo_original>
